<compile_context>
chip_gen: v5e
topology: v5e:2x2
jax: 0.10.0
libtpu: 0.0.40
codegen_flags: <defaults>
</compile_context>

<pallas_src>
import functools

import jax
import jax.numpy as jnp
import numpy as np
from jax.experimental import pallas as pl
from jax.experimental.pallas import tpu as pltpu


def mha_kernel(q_ref, k_ref, v_ref,
               wq_ref, bq_ref, wk_ref, bk_ref, wv_ref, bv_ref,
               wfc_ref, bfc_ref, gamma_ref, beta_ref,
               out_ref, attn_ref,
               kt_s, vh_s,
               *, n_head, eps, compute_dtype):
    """One (batch, q_tile) grid step.

    q_ref: [tq, d_model] f32, k_ref/v_ref: [L, d_model] (resident across q-tiles),
    out_ref: [tq, d_model], attn_ref: [n_head, 1, tq, L] (head-major, attn dtype).
    kt_s: [H, d_k, L] K^T head cache, vh_s: [H, L, d_v] V head cache — both
    computed once per batch element (qi == 0) and reused for every q-tile.
    """
    qi = pl.program_id(1)

    # --- K/V head projections: once per batch element, cached in VMEM ---
    @pl.when(qi == 0)
    def _project_kv():
        kin = k_ref[...].astype(compute_dtype)                  # [L, d_model]
        vin = v_ref[...].astype(compute_dtype)

        def proj(h, carry):
            kp = (jnp.dot(kin, wk_ref[h], preferred_element_type=jnp.float32)
                  + bk_ref[h])                                  # [L, d_k] f32
            # Transpose once per batch/head -> per-tile scores is a plain,
            # lane-dense MXU matmul (no per-tile XLU, no 128-lane pad waste).
            kt_s[h] = kp.T.astype(compute_dtype)                # [d_k, L]
            vp = (jnp.dot(vin, wv_ref[h], preferred_element_type=jnp.float32)
                  + bv_ref[h])                                  # [L, d_v] f32
            vh_s[h] = vp.astype(compute_dtype)
            return carry

        jax.lax.fori_loop(0, n_head, proj, 0)

    # --- this q tile: per-head attention; fc contribution accumulated in f32 ---
    q_res = q_ref[...]                                          # f32 residual
    q_c = q_res.astype(compute_dtype)
    tq, d_model = q_res.shape

    def head(h, y_acc):
        # Q projection (wq/bq pre-scaled by 1/sqrt(d_k) in the wrapper).
        qh = (jnp.dot(q_c, wq_ref[h], preferred_element_type=jnp.float32)
              + bq_ref[h]).astype(compute_dtype)                # [tq, d_k]
        scores = jnp.dot(qh, kt_s[h],
                         preferred_element_type=jnp.float32)    # [tq, L] f32
        # Softmax in f32 (v5e has no bf16 vector units); denom via EUP recip.
        m = jnp.max(scores, axis=-1, keepdims=True)
        e = jnp.exp(scores - m)
        denom = jnp.sum(e, axis=-1, keepdims=True)
        probs = e * pl.reciprocal(denom, approx=True)
        # TODO(synk): attention dropout (p=0.1) omitted — eval-mode identity.
        attn_ref[h] = probs.astype(attn_ref.dtype).reshape((1,) + probs.shape)
        ctx = jnp.dot(probs.astype(compute_dtype), vh_s[h],
                      preferred_element_type=jnp.float32)       # [tq, d_v]
        return y_acc + jnp.dot(ctx.astype(compute_dtype), wfc_ref[h],
                               preferred_element_type=jnp.float32)

    y = jax.lax.fori_loop(0, n_head, head,
                          jnp.zeros((tq, d_model), jnp.float32))

    # --- output bias + residual + LayerNorm (f32) ---
    # TODO(synk): output dropout (p=0.1) omitted — eval-mode identity.
    y = y + bfc_ref[...] + q_res
    mean = jnp.mean(y, axis=-1, keepdims=True)
    var = jnp.mean((y - mean) ** 2, axis=-1, keepdims=True)
    y = (y - mean) * jax.lax.rsqrt(var + eps)
    out_ref[...] = (y * gamma_ref[...] + beta_ref[...]).astype(out_ref.dtype)


def _vmem_capacity_bytes():
    try:
        return int(pltpu.get_tpu_info().vmem_capacity_bytes)
    except Exception:
        return 64 * 1024 * 1024      # conservative (v7x per-TC)


def _ceil(n, m):
    return ((n + m - 1) // m) * m


def _vmem_bytes(L, tq, d_model, n_head, d_k, d_v, cbytes, abytes):
    """Bytes of live VMEM: pipelined blocks (x2), constants (x2), scratch and
    in-kernel intermediates, lane/sublane padded."""
    f32 = 4
    t2 = lambda r, c, b: _ceil(r, 8) * _ceil(c, 128) * b
    total = 0
    # double-buffered pipeline blocks
    total += 2 * t2(tq, d_model, f32)                           # q in
    total += 2 * 2 * t2(L, d_model, cbytes)                     # k, v in
    total += 2 * t2(tq, d_model, f32)                           # out
    total += 2 * n_head * t2(tq, L, abytes)                     # attn out (dominant)
    # grid-constant operands (double-buffered by default)
    total += 2 * n_head * (2 * t2(d_model, d_k, cbytes) + t2(d_model, d_v, cbytes))
    total += 2 * n_head * t2(d_v, d_model, cbytes)              # wfc
    total += 2 * (2 * n_head * t2(1, d_k, f32) + n_head * t2(1, d_v, f32)
                  + 3 * t2(1, d_model, f32))                    # biases / LN params
    # persistent scratch
    total += n_head * t2(d_k, L, cbytes)                        # K^T cache
    total += n_head * t2(L, d_v, cbytes)                        # V cache
    # live in-kernel intermediates (one head's f32 softmax + fc accumulator)
    total += 3 * t2(tq, L, f32)                                 # scores / e / probs
    total += 2 * t2(tq, d_model, f32)                           # y acc + residual
    return total


def _pick_q_tile(L, d_model, n_head, d_k, d_v, cbytes, abytes, budget):
    cands = sorted({t for t in (L, 1024, 512, 256, 128) if t <= L and L % t == 0},
                   reverse=True)
    for t in cands:
        if _vmem_bytes(L, t, d_model, n_head, d_k, d_v, cbytes, abytes) <= budget:
            return t
    return cands[-1]    # best effort (smallest legal tile)


def multi_head_attention(q, k, v, params, *, n_head, d_k, d_v,
                         compute_dtype=jnp.bfloat16, attn_dtype=jnp.bfloat16,
                         q_tile=None):
    """q, k, v: [B, L, d_model] float32.  Returns (output [B, L, d_model] f32,
    attention [n_head*B, L, L] in attn_dtype) — same semantics as the PyTorch
    module in eval mode (attention stored in bf16 by default for HBM bandwidth)."""
    B, L, d_model = q.shape
    eps = 1e-5
    inv_scale = 1.0 / float(np.power(d_k, 0.5))

    cbytes = jnp.dtype(compute_dtype).itemsize
    abytes = jnp.dtype(attn_dtype).itemsize
    capacity = _vmem_capacity_bytes()
    if q_tile is None:
        tq = _pick_q_tile(L, d_model, n_head, d_k, d_v, cbytes, abytes,
                          budget=int(capacity * 0.75))
    else:
        assert L % q_tile == 0, "q_tile must divide L"
        tq = q_tile
    n_qt = L // tq
    est = _vmem_bytes(L, tq, d_model, n_head, d_k, d_v, cbytes, abytes)
    vmem_limit = int(min(capacity - (2 << 20), max(int(est * 1.25), 32 << 20)))
    vmem_limit = max(vmem_limit, 16 << 20)

    # Head-major weights; fold 1/sqrt(d_k) into wq/bq (free, outside the kernel).
    def heads_first(w, dh):
        return jnp.transpose(w.reshape(d_model, n_head, dh), (1, 0, 2))

    wq = heads_first(params["wq"] * inv_scale, d_k).astype(compute_dtype)
    wk = heads_first(params["wk"], d_k).astype(compute_dtype)
    wv = heads_first(params["wv"], d_v).astype(compute_dtype)
    bq = (params["bq"] * inv_scale).reshape(n_head, 1, d_k)
    bk = params["bk"].reshape(n_head, 1, d_k)
    bv = params["bv"].reshape(n_head, 1, d_v)
    wfc = params["wfc"].reshape(n_head, d_v, d_model).astype(compute_dtype)

    # k/v only feed the projections (compute dtype) -> cast once, halves their DMA.
    k_c = k.astype(compute_dtype)
    v_c = v.astype(compute_dtype)

    kernel = functools.partial(mha_kernel, n_head=n_head, eps=eps,
                               compute_dtype=compute_dtype)

    def const(shape):  # grid-invariant (weights / biases / LN params)
        return pl.BlockSpec(shape, lambda b, t: (0,) * len(shape))

    out, attn = pl.pallas_call(
        kernel,
        out_shape=(
            jax.ShapeDtypeStruct((B, L, d_model), jnp.float32),
            jax.ShapeDtypeStruct((n_head, B, L, L), attn_dtype),   # head-major
        ),
        grid_spec=pltpu.PrefetchScalarGridSpec(
            num_scalar_prefetch=0,
            grid=(B, n_qt),
            in_specs=[
                pl.BlockSpec((None, tq, d_model), lambda b, t: (b, t, 0)),  # q tile
                pl.BlockSpec((None, L, d_model), lambda b, t: (b, 0, 0)),   # k
                pl.BlockSpec((None, L, d_model), lambda b, t: (b, 0, 0)),   # v
                const(wq.shape), const(bq.shape),
                const(wk.shape), const(bk.shape),
                const(wv.shape), const(bv.shape),
                const(wfc.shape), const(params["bfc"].shape),
                const(params["gamma"].shape), const(params["beta"].shape),
            ],
            out_specs=[
                pl.BlockSpec((None, tq, d_model), lambda b, t: (b, t, 0)),
                pl.BlockSpec((n_head, 1, tq, L), lambda b, t: (0, b, t, 0)),
            ],
            scratch_shapes=[
                pltpu.VMEM((n_head, d_k, L), compute_dtype),   # K^T head cache
                pltpu.VMEM((n_head, L, d_v), compute_dtype),   # V head cache
            ]),
        compiler_params=pltpu.CompilerParams(
            dimension_semantics=("parallel", "arbitrary"),
            vmem_limit_bytes=vmem_limit),
    )(q, k_c, v_c, wq, bq, wk, bk, wv, bv,
      wfc, params["bfc"], params["gamma"], params["beta"])

    # (n_head, B, L, L) -> (n_head*B, L, L): contiguous reshape, no transpose pass.
    return out, attn.reshape(n_head * B, L, L)


def init_params(key, d_model, n_head, d_k, d_v):
    ks = jax.random.split(key, 8)
    std_qk = np.sqrt(2.0 / (d_model + d_k))
    std_v = np.sqrt(2.0 / (d_model + d_v))
    # Weights stored pre-transposed ([in, out]) so the math is x @ W.
    return {
        "wq": (jax.random.normal(ks[0], (d_model, n_head * d_k)) * std_qk).astype(jnp.float32),
        "wk": (jax.random.normal(ks[1], (d_model, n_head * d_k)) * std_qk).astype(jnp.float32),
        "wv": (jax.random.normal(ks[2], (d_model, n_head * d_v)) * std_v).astype(jnp.float32),
        "bq": (jax.random.normal(ks[3], (1, n_head * d_k)) * 0.02).astype(jnp.float32),
        "bk": (jax.random.normal(ks[4], (1, n_head * d_k)) * 0.02).astype(jnp.float32),
        "bv": (jax.random.normal(ks[5], (1, n_head * d_v)) * 0.02).astype(jnp.float32),
        "wfc": (jax.random.normal(ks[6], (n_head * d_v, d_model))
                * np.sqrt(1.0 / (n_head * d_v))).astype(jnp.float32),
        "bfc": (jax.random.normal(ks[7], (1, d_model)) * 0.02).astype(jnp.float32),
        "gamma": jnp.ones((1, d_model), jnp.float32),
        "beta": jnp.zeros((1, d_model), jnp.float32),
    }


def reference(q, k, v, params, *, n_head, d_k, d_v):
    B, L, d_model = q.shape
    scale = np.power(d_k, 0.5)
    qp = (q @ params["wq"] + params["bq"]).reshape(B, L, n_head, d_k)
    kp = (k @ params["wk"] + params["bk"]).reshape(B, L, n_head, d_k)
    vp = (v @ params["wv"] + params["bv"]).reshape(B, L, n_head, d_v)
    qh = jnp.transpose(qp, (2, 0, 1, 3)).reshape(-1, L, d_k)
    kh = jnp.transpose(kp, (2, 0, 1, 3)).reshape(-1, L, d_k)
    vh = jnp.transpose(vp, (2, 0, 1, 3)).reshape(-1, L, d_v)
    attn = jax.nn.softmax(jnp.einsum("bqd,bkd->bqk", qh, kh) / scale, axis=-1)
    out = jnp.einsum("bqk,bkd->bqd", attn, vh).reshape(n_head, B, L, d_v)
    out = jnp.transpose(out, (1, 2, 0, 3)).reshape(B, L, n_head * d_v)
    out = out @ params["wfc"] + params["bfc"]
    y = out + q
    mean = jnp.mean(y, axis=-1, keepdims=True)
    var = jnp.mean((y - mean) ** 2, axis=-1, keepdims=True)
    y = (y - mean) / jnp.sqrt(var + 1e-5)
    return y * params["gamma"] + params["beta"], attn


if __name__ == "__main__":
    root = jax.random.PRNGKey(0)
    keys = jax.random.split(root, 8)

    # --- Test 1: small module-like shapes -------------------------------------
    B, L, d_model = 2, 8, 32
    n_head, d_k, d_v = 4, 8, 8
    q = jax.random.normal(keys[0], (B, L, d_model), jnp.float32)
    k = jax.random.normal(keys[1], (B, L, d_model), jnp.float32)
    v = jax.random.normal(keys[2], (B, L, d_model), jnp.float32)
    params = init_params(keys[3], d_model, n_head, d_k, d_v)
    out_r, attn_r = reference(q, k, v, params, n_head=n_head, d_k=d_k, d_v=d_v)

    # f32 MXU + f32 attn output: tight check (approx-reciprocal is the only deviation;
    # it also means attention rows do not sum to exactly 1).
    out32, attn32 = multi_head_attention(q, k, v, params, n_head=n_head, d_k=d_k,
                                         d_v=d_v, compute_dtype=jnp.float32,
                                         attn_dtype=jnp.float32)
    out32 = jax.block_until_ready(out32)
    attn32 = jax.block_until_ready(attn32)
    assert out32.shape == (B, L, d_model)
    assert attn32.shape == (n_head * B, L, L)
    np.testing.assert_allclose(np.asarray(out32), np.asarray(out_r), rtol=5e-3, atol=5e-3)
    np.testing.assert_allclose(np.asarray(attn32), np.asarray(attn_r), rtol=5e-3, atol=5e-3)

    # Default perf path: bf16 MXU operands + bf16 attention writeback.
    out16, attn16 = multi_head_attention(q, k, v, params, n_head=n_head, d_k=d_k, d_v=d_v)
    out16 = jax.block_until_ready(out16)
    attn16 = jax.block_until_ready(attn16)
    np.testing.assert_allclose(np.asarray(out16), np.asarray(out_r), rtol=5e-2, atol=5e-2)
    np.testing.assert_allclose(np.asarray(attn16.astype(jnp.float32)), np.asarray(attn_r),
                               rtol=5e-2, atol=5e-2)

    # --- Test 2: forces q-tiling (n_qt=2) to exercise the K/V cache carry -----
    B2, L2, dm2 = 1, 256, 128
    h2, dk2, dv2 = 2, 32, 32
    q2 = jax.random.normal(keys[4], (B2, L2, dm2), jnp.float32)
    k2 = jax.random.normal(keys[5], (B2, L2, dm2), jnp.float32)
    v2 = jax.random.normal(keys[6], (B2, L2, dm2), jnp.float32)
    p2 = init_params(keys[7], dm2, h2, dk2, dv2)
    out2_r, attn2_r = reference(q2, k2, v2, p2, n_head=h2, d_k=dk2, d_v=dv2)
    out2, attn2 = multi_head_attention(q2, k2, v2, p2, n_head=h2, d_k=dk2, d_v=dv2,
                                       q_tile=128)
    out2 = jax.block_until_ready(out2)
    attn2 = jax.block_until_ready(attn2)
    np.testing.assert_allclose(np.asarray(out2), np.asarray(out2_r), rtol=5e-2, atol=7e-2)
    np.testing.assert_allclose(np.asarray(attn2.astype(jnp.float32)), np.asarray(attn2_r),
                               rtol=5e-2, atol=7e-2)

    print("KERNEL_OK")
</pallas_src>

<mosaic_0001>
module attributes {stable_mosaic.version = 11 : i64} {
  func.func @mha_kernel(%arg0: i32, %arg1: i32, %arg2: memref<1x8x32xf32, #tpu.memory_space<vmem>>, %arg3: memref<1x8x32xf32, #tpu.memory_space<vmem>>, %arg4: memref<1x8x32xf32, #tpu.memory_space<vmem>>, %arg5: memref<4x32x8xf32, #tpu.memory_space<vmem>>, %arg6: memref<4x1x8xf32, #tpu.memory_space<vmem>>, %arg7: memref<4x32x8xf32, #tpu.memory_space<vmem>>, %arg8: memref<4x1x8xf32, #tpu.memory_space<vmem>>, %arg9: memref<4x32x8xf32, #tpu.memory_space<vmem>>, %arg10: memref<4x1x8xf32, #tpu.memory_space<vmem>>, %arg11: memref<4x8x32xf32, #tpu.memory_space<vmem>>, %arg12: memref<1x32xf32, #tpu.memory_space<vmem>>, %arg13: memref<1x32xf32, #tpu.memory_space<vmem>>, %arg14: memref<1x32xf32, #tpu.memory_space<vmem>>, %arg15: memref<1x8x32xf32, #tpu.memory_space<vmem>>, %arg16: memref<4x1x8x8xf32, #tpu.memory_space<vmem>>, %arg17: memref<4x8x8xf32, #tpu.memory_space<vmem>>, %arg18: memref<4x8x8xf32, #tpu.memory_space<vmem>>) attributes {dimension_semantics = [#tpu.dimension_semantics<parallel>, #tpu.dimension_semantics<arbitrary>], iteration_bounds = array<i64: 2, 1>, scalar_prefetch = 0 : i64, scratch_operands = 2 : i64, tpu.core_type = #tpu.core_type<tc>, window_params = [{transform_indices = @transform_0, window_bounds = array<i64: 1, 8, 32>}, {transform_indices = @transform_1, window_bounds = array<i64: 1, 8, 32>}, {transform_indices = @transform_2, window_bounds = array<i64: 1, 8, 32>}, {pipeline_mode = #tpu.pipeline_mode<synchronous>, transform_indices = @transform_3, window_bounds = array<i64: 4, 32, 8>}, {pipeline_mode = #tpu.pipeline_mode<synchronous>, transform_indices = @transform_4, window_bounds = array<i64: 4, 1, 8>}, {pipeline_mode = #tpu.pipeline_mode<synchronous>, transform_indices = @transform_5, window_bounds = array<i64: 4, 32, 8>}, {pipeline_mode = #tpu.pipeline_mode<synchronous>, transform_indices = @transform_6, window_bounds = array<i64: 4, 1, 8>}, {pipeline_mode = #tpu.pipeline_mode<synchronous>, transform_indices = @transform_7, window_bounds = array<i64: 4, 32, 8>}, {pipeline_mode = #tpu.pipeline_mode<synchronous>, transform_indices = @transform_8, window_bounds = array<i64: 4, 1, 8>}, {pipeline_mode = #tpu.pipeline_mode<synchronous>, transform_indices = @transform_9, window_bounds = array<i64: 4, 8, 32>}, {pipeline_mode = #tpu.pipeline_mode<synchronous>, transform_indices = @transform_10, window_bounds = array<i64: 1, 32>}, {pipeline_mode = #tpu.pipeline_mode<synchronous>, transform_indices = @transform_11, window_bounds = array<i64: 1, 32>}, {pipeline_mode = #tpu.pipeline_mode<synchronous>, transform_indices = @transform_12, window_bounds = array<i64: 1, 32>}, {transform_indices = @transform_13, window_bounds = array<i64: 1, 8, 32>}, {transform_indices = @transform_14, window_bounds = array<i64: 4, 1, 8, 8>}]} {
    %c0_i32 = arith.constant 0 : i32
    %0 = arith.cmpi eq, %arg1, %c0_i32 : i32
    %1 = arith.extui %0 : i1 to i32
    %c0_i32_0 = arith.constant 0 : i32
    %2 = arith.cmpi ne, %1, %c0_i32_0 : i32
    scf.if %2 {
      %c0_19 = arith.constant 0 : index
      %c0_20 = arith.constant 0 : index
      %c0_21 = arith.constant 0 : index
      %39 = vector.load %arg3[%c0_19, %c0_20, %c0_21] : memref<1x8x32xf32, #tpu.memory_space<vmem>>, vector<1x8x32xf32>
      %40 = vector.shape_cast %39 : vector<1x8x32xf32> to vector<8x32xf32>
      %c0_22 = arith.constant 0 : index
      %c0_23 = arith.constant 0 : index
      %c0_24 = arith.constant 0 : index
      %41 = vector.load %arg4[%c0_22, %c0_23, %c0_24] : memref<1x8x32xf32, #tpu.memory_space<vmem>>, vector<1x8x32xf32>
      %42 = vector.shape_cast %41 : vector<1x8x32xf32> to vector<8x32xf32>
      %c0_i32_25 = arith.constant 0 : i32
      %c4_i32_26 = arith.constant 4 : i32
      %43 = arith.addi %c0_i32_25, %c4_i32_26 : i32
      %c1_i32_27 = arith.constant 1 : i32
      scf.for %arg19 = %c0_i32_25 to %43 step %c1_i32_27  : i32 {
        %44 = arith.index_cast %arg19 : i32 to index
        %c0_29 = arith.constant 0 : index
        %c0_30 = arith.constant 0 : index
        %45 = vector.load %arg7[%44, %c0_29, %c0_30] : memref<4x32x8xf32, #tpu.memory_space<vmem>>, vector<1x32x8xf32>
        %46 = vector.shape_cast %45 : vector<1x32x8xf32> to vector<32x8xf32>
        %cst_31 = arith.constant dense<0.000000e+00> : vector<8x8xf32>
        %47 = tpu.matmul %40, %46, %cst_31 {dimension_numbers = #tpu.dot_dimension_numbers<[1], [0], [0], [1], [0, 0, 1, 1], [], []>} : vector<8x32xf32>, vector<32x8xf32>, vector<8x8xf32> -> vector<8x8xf32>
        %48 = arith.index_cast %arg19 : i32 to index
        %c0_32 = arith.constant 0 : index
        %c0_33 = arith.constant 0 : index
        %49 = vector.load %arg8[%48, %c0_32, %c0_33] : memref<4x1x8xf32, #tpu.memory_space<vmem>>, vector<1x1x8xf32>
        %50 = vector.shape_cast %49 : vector<1x1x8xf32> to vector<1x8xf32>
        %51 = vector.broadcast %50 : vector<1x8xf32> to vector<8x8xf32>
        %52 = arith.addf %47, %51 : vector<8x8xf32>
        %53 = tpu.transpose %52, [1, 0] : vector<8x8xf32> -> vector<8x8xf32>
        %54 = arith.index_cast %arg19 : i32 to index
        %c0_34 = arith.constant 0 : index
        %c0_35 = arith.constant 0 : index
        %55 = vector.load %arg17[%54, %c0_34, %c0_35] : memref<4x8x8xf32, #tpu.memory_space<vmem>>, vector<1x8x8xf32>
        %56 = vector.shape_cast %55 : vector<1x8x8xf32> to vector<8x8xf32>
        %57 = vector.shape_cast %53 : vector<8x8xf32> to vector<1x8x8xf32>
        tpu.vector_store %arg17[%54, %c0_34, %c0_35], %57 {strides = array<i32>} : memref<4x8x8xf32, #tpu.memory_space<vmem>>, vector<1x8x8xf32>,
        %58 = arith.index_cast %arg19 : i32 to index
        %c0_36 = arith.constant 0 : index
        %c0_37 = arith.constant 0 : index
        %59 = vector.load %arg9[%58, %c0_36, %c0_37] : memref<4x32x8xf32, #tpu.memory_space<vmem>>, vector<1x32x8xf32>
        %60 = vector.shape_cast %59 : vector<1x32x8xf32> to vector<32x8xf32>
        %cst_38 = arith.constant dense<0.000000e+00> : vector<8x8xf32>
        %61 = tpu.matmul %42, %60, %cst_38 {dimension_numbers = #tpu.dot_dimension_numbers<[1], [0], [0], [1], [0, 0, 1, 1], [], []>} : vector<8x32xf32>, vector<32x8xf32>, vector<8x8xf32> -> vector<8x8xf32>
        %62 = arith.index_cast %arg19 : i32 to index
        %c0_39 = arith.constant 0 : index
        %c0_40 = arith.constant 0 : index
        %63 = vector.load %arg10[%62, %c0_39, %c0_40] : memref<4x1x8xf32, #tpu.memory_space<vmem>>, vector<1x1x8xf32>
        %64 = vector.shape_cast %63 : vector<1x1x8xf32> to vector<1x8xf32>
        %65 = vector.broadcast %64 : vector<1x8xf32> to vector<8x8xf32>
        %66 = arith.addf %61, %65 : vector<8x8xf32>
        %67 = arith.index_cast %arg19 : i32 to index
        %c0_41 = arith.constant 0 : index
        %c0_42 = arith.constant 0 : index
        %68 = vector.load %arg18[%67, %c0_41, %c0_42] : memref<4x8x8xf32, #tpu.memory_space<vmem>>, vector<1x8x8xf32>
        %69 = vector.shape_cast %68 : vector<1x8x8xf32> to vector<8x8xf32>
        %70 = vector.shape_cast %66 : vector<8x8xf32> to vector<1x8x8xf32>
        tpu.vector_store %arg18[%67, %c0_41, %c0_42], %70 {strides = array<i32>} : memref<4x8x8xf32, #tpu.memory_space<vmem>>, vector<1x8x8xf32>,
      }
      %c4_i32_28 = arith.constant 4 : i32
    } else {
    }
    %c0 = arith.constant 0 : index
    %c0_1 = arith.constant 0 : index
    %c0_2 = arith.constant 0 : index
    %3 = vector.load %arg2[%c0, %c0_1, %c0_2] : memref<1x8x32xf32, #tpu.memory_space<vmem>>, vector<1x8x32xf32>
    %4 = vector.shape_cast %3 : vector<1x8x32xf32> to vector<8x32xf32>
    %cst = arith.constant 0.000000e+00 : f32
    %5 = vector.broadcast %cst : f32 to vector<8x32xf32>
    %c0_i32_3 = arith.constant 0 : i32
    %c4_i32 = arith.constant 4 : i32
    %6 = arith.addi %c0_i32_3, %c4_i32 : i32
    %c1_i32 = arith.constant 1 : i32
    %7 = scf.for %arg19 = %c0_i32_3 to %6 step %c1_i32 iter_args(%arg20 = %5) -> (vector<8x32xf32>)  : i32 {
      %39 = arith.index_cast %arg19 : i32 to index
      %c0_19 = arith.constant 0 : index
      %c0_20 = arith.constant 0 : index
      %40 = vector.load %arg5[%39, %c0_19, %c0_20] : memref<4x32x8xf32, #tpu.memory_space<vmem>>, vector<1x32x8xf32>
      %41 = vector.shape_cast %40 : vector<1x32x8xf32> to vector<32x8xf32>
      %cst_21 = arith.constant dense<0.000000e+00> : vector<8x8xf32>
      %42 = tpu.matmul %4, %41, %cst_21 {dimension_numbers = #tpu.dot_dimension_numbers<[1], [0], [0], [1], [0, 0, 1, 1], [], []>} : vector<8x32xf32>, vector<32x8xf32>, vector<8x8xf32> -> vector<8x8xf32>
      %43 = arith.index_cast %arg19 : i32 to index
      %c0_22 = arith.constant 0 : index
      %c0_23 = arith.constant 0 : index
      %44 = vector.load %arg6[%43, %c0_22, %c0_23] : memref<4x1x8xf32, #tpu.memory_space<vmem>>, vector<1x1x8xf32>
      %45 = vector.shape_cast %44 : vector<1x1x8xf32> to vector<1x8xf32>
      %46 = vector.broadcast %45 : vector<1x8xf32> to vector<8x8xf32>
      %47 = arith.addf %42, %46 : vector<8x8xf32>
      %48 = arith.index_cast %arg19 : i32 to index
      %c0_24 = arith.constant 0 : index
      %c0_25 = arith.constant 0 : index
      %49 = vector.load %arg17[%48, %c0_24, %c0_25] : memref<4x8x8xf32, #tpu.memory_space<vmem>>, vector<1x8x8xf32>
      %50 = vector.shape_cast %49 : vector<1x8x8xf32> to vector<8x8xf32>
      %cst_26 = arith.constant dense<0.000000e+00> : vector<8x8xf32>
      %51 = tpu.matmul %47, %50, %cst_26 {dimension_numbers = #tpu.dot_dimension_numbers<[1], [0], [0], [1], [0, 0, 1, 1], [], []>} : vector<8x8xf32>, vector<8x8xf32>, vector<8x8xf32> -> vector<8x8xf32>
      %cst_27 = arith.constant dense<0xFF800000> : vector<8xf32>
      %52 = vector.multi_reduction <maximumf>, %51, %cst_27 [1] : vector<8x8xf32> to vector<8xf32>
      %53 = vector.shape_cast %52 : vector<8xf32> to vector<8x1xf32>
      %54 = vector.broadcast %53 : vector<8x1xf32> to vector<8x8xf32>
      %55 = arith.subf %51, %54 : vector<8x8xf32>
      %56 = math.exp %55 : vector<8x8xf32>
      %cst_28 = arith.constant dense<0.000000e+00> : vector<8xf32>
      %57 = vector.multi_reduction <add>, %56, %cst_28 [1] : vector<8x8xf32> to vector<8xf32>
      %58 = vector.shape_cast %57 : vector<8xf32> to vector<8x1xf32>
      %59 = tpu.reciprocal %58 {approx = true} : vector<8x1xf32> -> vector<8x1xf32>
      %60 = vector.broadcast %59 : vector<8x1xf32> to vector<8x8xf32>
      %61 = arith.mulf %56, %60 : vector<8x8xf32>
      %62 = vector.shape_cast %61 : vector<8x8xf32> to vector<1x8x8xf32>
      %63 = arith.index_cast %arg19 : i32 to index
      %c0_29 = arith.constant 0 : index
      %c0_30 = arith.constant 0 : index
      %c0_31 = arith.constant 0 : index
      %64 = vector.load %arg16[%63, %c0_29, %c0_30, %c0_31] : memref<4x1x8x8xf32, #tpu.memory_space<vmem>>, vector<1x1x8x8xf32>
      %65 = vector.shape_cast %64 : vector<1x1x8x8xf32> to vector<1x8x8xf32>
      %66 = vector.shape_cast %62 : vector<1x8x8xf32> to vector<1x1x8x8xf32>
      tpu.vector_store %arg16[%63, %c0_29, %c0_30, %c0_31], %66 {strides = array<i32>} : memref<4x1x8x8xf32, #tpu.memory_space<vmem>>, vector<1x1x8x8xf32>,
      %67 = arith.index_cast %arg19 : i32 to index
      %c0_32 = arith.constant 0 : index
      %c0_33 = arith.constant 0 : index
      %68 = vector.load %arg18[%67, %c0_32, %c0_33] : memref<4x8x8xf32, #tpu.memory_space<vmem>>, vector<1x8x8xf32>
      %69 = vector.shape_cast %68 : vector<1x8x8xf32> to vector<8x8xf32>
      %cst_34 = arith.constant dense<0.000000e+00> : vector<8x8xf32>
      %70 = tpu.matmul %61, %69, %cst_34 {dimension_numbers = #tpu.dot_dimension_numbers<[1], [0], [0], [1], [0, 0, 1, 1], [], []>} : vector<8x8xf32>, vector<8x8xf32>, vector<8x8xf32> -> vector<8x8xf32>
      %71 = arith.index_cast %arg19 : i32 to index
      %c0_35 = arith.constant 0 : index
      %c0_36 = arith.constant 0 : index
      %72 = vector.load %arg11[%71, %c0_35, %c0_36] : memref<4x8x32xf32, #tpu.memory_space<vmem>>, vector<1x8x32xf32>
      %73 = vector.shape_cast %72 : vector<1x8x32xf32> to vector<8x32xf32>
      %cst_37 = arith.constant dense<0.000000e+00> : vector<8x32xf32>
      %74 = tpu.matmul %70, %73, %cst_37 {dimension_numbers = #tpu.dot_dimension_numbers<[1], [0], [0], [1], [0, 0, 1, 1], [], []>} : vector<8x8xf32>, vector<8x32xf32>, vector<8x32xf32> -> vector<8x32xf32>
      %75 = arith.addf %arg20, %74 : vector<8x32xf32>
      scf.yield %75 : vector<8x32xf32>
    }
    %c4_i32_4 = arith.constant 4 : i32
    %c0_5 = arith.constant 0 : index
    %c0_6 = arith.constant 0 : index
    %8 = vector.load %arg12[%c0_5, %c0_6] : memref<1x32xf32, #tpu.memory_space<vmem>>, vector<1x32xf32>
    %9 = vector.broadcast %8 : vector<1x32xf32> to vector<8x32xf32>
    %10 = arith.addf %7, %9 : vector<8x32xf32>
    %11 = arith.addf %10, %4 : vector<8x32xf32>
    %cst_7 = arith.constant dense<0.000000e+00> : vector<8xf32>
    %12 = vector.multi_reduction <add>, %11, %cst_7 [1] : vector<8x32xf32> to vector<8xf32>
    %13 = vector.shape_cast %12 : vector<8xf32> to vector<8x1xf32>
    %cst_8 = arith.constant 3.200000e+01 : f32
    %14 = vector.broadcast %cst_8 : f32 to vector<8x1xf32>
    %15 = arith.divf %13, %14 : vector<8x1xf32>
    %16 = vector.broadcast %15 : vector<8x1xf32> to vector<8x32xf32>
    %17 = arith.subf %11, %16 : vector<8x32xf32>
    %18 = arith.mulf %17, %17 : vector<8x32xf32>
    %cst_9 = arith.constant dense<0.000000e+00> : vector<8xf32>
    %19 = vector.multi_reduction <add>, %18, %cst_9 [1] : vector<8x32xf32> to vector<8xf32>
    %20 = vector.shape_cast %19 : vector<8xf32> to vector<8x1xf32>
    %cst_10 = arith.constant 3.200000e+01 : f32
    %21 = vector.broadcast %cst_10 : f32 to vector<8x1xf32>
    %22 = arith.divf %20, %21 : vector<8x1xf32>
    %23 = vector.broadcast %15 : vector<8x1xf32> to vector<8x32xf32>
    %24 = arith.subf %11, %23 : vector<8x32xf32>
    %cst_11 = arith.constant 9.99999974E-6 : f32
    %25 = vector.broadcast %cst_11 : f32 to vector<8x1xf32>
    %26 = arith.addf %22, %25 : vector<8x1xf32>
    %27 = math.rsqrt %26 : vector<8x1xf32>
    %28 = vector.broadcast %27 : vector<8x1xf32> to vector<8x32xf32>
    %29 = arith.mulf %24, %28 : vector<8x32xf32>
    %c0_12 = arith.constant 0 : index
    %c0_13 = arith.constant 0 : index
    %30 = vector.load %arg13[%c0_12, %c0_13] : memref<1x32xf32, #tpu.memory_space<vmem>>, vector<1x32xf32>
    %31 = vector.broadcast %30 : vector<1x32xf32> to vector<8x32xf32>
    %32 = arith.mulf %29, %31 : vector<8x32xf32>
    %c0_14 = arith.constant 0 : index
    %c0_15 = arith.constant 0 : index
    %33 = vector.load %arg14[%c0_14, %c0_15] : memref<1x32xf32, #tpu.memory_space<vmem>>, vector<1x32xf32>
    %34 = vector.broadcast %33 : vector<1x32xf32> to vector<8x32xf32>
    %35 = arith.addf %32, %34 : vector<8x32xf32>
    %c0_16 = arith.constant 0 : index
    %c0_17 = arith.constant 0 : index
    %c0_18 = arith.constant 0 : index
    %36 = vector.load %arg15[%c0_16, %c0_17, %c0_18] : memref<1x8x32xf32, #tpu.memory_space<vmem>>, vector<1x8x32xf32>
    %37 = vector.shape_cast %36 : vector<1x8x32xf32> to vector<8x32xf32>
    %38 = vector.shape_cast %35 : vector<8x32xf32> to vector<1x8x32xf32>
    tpu.vector_store %arg15[%c0_16, %c0_17, %c0_18], %38 {strides = array<i32>} : memref<1x8x32xf32, #tpu.memory_space<vmem>>, vector<1x8x32xf32>,
    return
  }
  func.func @transform_0(%arg0: i32, %arg1: i32) -> (i32, i32, i32) {
    %c0_i32 = arith.constant 0 : i32
    %c0_i32_0 = arith.constant 0 : i32
    return %arg0, %arg1, %c0_i32 : i32, i32, i32
  }
  func.func @transform_1(%arg0: i32, %arg1: i32) -> (i32, i32, i32) {
    %c0_i32 = arith.constant 0 : i32
    %c0_i32_0 = arith.constant 0 : i32
    %c0_i32_1 = arith.constant 0 : i32
    return %arg0, %c0_i32, %c0_i32_0 : i32, i32, i32
  }
  func.func @transform_2(%arg0: i32, %arg1: i32) -> (i32, i32, i32) {
    %c0_i32 = arith.constant 0 : i32
    %c0_i32_0 = arith.constant 0 : i32
    %c0_i32_1 = arith.constant 0 : i32
    return %arg0, %c0_i32, %c0_i32_0 : i32, i32, i32
  }
  func.func @transform_3(%arg0: i32, %arg1: i32) -> (i32, i32, i32) {
    %c0_i32 = arith.constant 0 : i32
    %c0_i32_0 = arith.constant 0 : i32
    %c0_i32_1 = arith.constant 0 : i32
    %c0_i32_2 = arith.constant 0 : i32
    return %c0_i32, %c0_i32_0, %c0_i32_1 : i32, i32, i32
  }
  func.func @transform_4(%arg0: i32, %arg1: i32) -> (i32, i32, i32) {
    %c0_i32 = arith.constant 0 : i32
    %c0_i32_0 = arith.constant 0 : i32
    %c0_i32_1 = arith.constant 0 : i32
    %c0_i32_2 = arith.constant 0 : i32
    return %c0_i32, %c0_i32_0, %c0_i32_1 : i32, i32, i32
  }
  func.func @transform_5(%arg0: i32, %arg1: i32) -> (i32, i32, i32) {
    %c0_i32 = arith.constant 0 : i32
    %c0_i32_0 = arith.constant 0 : i32
    %c0_i32_1 = arith.constant 0 : i32
    %c0_i32_2 = arith.constant 0 : i32
    return %c0_i32, %c0_i32_0, %c0_i32_1 : i32, i32, i32
  }
  func.func @transform_6(%arg0: i32, %arg1: i32) -> (i32, i32, i32) {
    %c0_i32 = arith.constant 0 : i32
    %c0_i32_0 = arith.constant 0 : i32
    %c0_i32_1 = arith.constant 0 : i32
    %c0_i32_2 = arith.constant 0 : i32
    return %c0_i32, %c0_i32_0, %c0_i32_1 : i32, i32, i32
  }
  func.func @transform_7(%arg0: i32, %arg1: i32) -> (i32, i32, i32) {
    %c0_i32 = arith.constant 0 : i32
    %c0_i32_0 = arith.constant 0 : i32
    %c0_i32_1 = arith.constant 0 : i32
    %c0_i32_2 = arith.constant 0 : i32
    return %c0_i32, %c0_i32_0, %c0_i32_1 : i32, i32, i32
  }
  func.func @transform_8(%arg0: i32, %arg1: i32) -> (i32, i32, i32) {
    %c0_i32 = arith.constant 0 : i32
    %c0_i32_0 = arith.constant 0 : i32
    %c0_i32_1 = arith.constant 0 : i32
    %c0_i32_2 = arith.constant 0 : i32
    return %c0_i32, %c0_i32_0, %c0_i32_1 : i32, i32, i32
  }
  func.func @transform_9(%arg0: i32, %arg1: i32) -> (i32, i32, i32) {
    %c0_i32 = arith.constant 0 : i32
    %c0_i32_0 = arith.constant 0 : i32
    %c0_i32_1 = arith.constant 0 : i32
    %c0_i32_2 = arith.constant 0 : i32
    return %c0_i32, %c0_i32_0, %c0_i32_1 : i32, i32, i32
  }
  func.func @transform_10(%arg0: i32, %arg1: i32) -> (i32, i32) {
    %c0_i32 = arith.constant 0 : i32
    %c0_i32_0 = arith.constant 0 : i32
    %c0_i32_1 = arith.constant 0 : i32
    return %c0_i32, %c0_i32_0 : i32, i32
  }
  func.func @transform_11(%arg0: i32, %arg1: i32) -> (i32, i32) {
    %c0_i32 = arith.constant 0 : i32
    %c0_i32_0 = arith.constant 0 : i32
    %c0_i32_1 = arith.constant 0 : i32
    return %c0_i32, %c0_i32_0 : i32, i32
  }
  func.func @transform_12(%arg0: i32, %arg1: i32) -> (i32, i32) {
    %c0_i32 = arith.constant 0 : i32
    %c0_i32_0 = arith.constant 0 : i32
    %c0_i32_1 = arith.constant 0 : i32
    return %c0_i32, %c0_i32_0 : i32, i32
  }
  func.func @transform_13(%arg0: i32, %arg1: i32) -> (i32, i32, i32) {
    %c0_i32 = arith.constant 0 : i32
    %c0_i32_0 = arith.constant 0 : i32
    return %arg0, %arg1, %c0_i32 : i32, i32, i32
  }
  func.func @transform_14(%arg0: i32, %arg1: i32) -> (i32, i32, i32, i32) {
    %c0_i32 = arith.constant 0 : i32
    %c0_i32_0 = arith.constant 0 : i32
    %c0_i32_1 = arith.constant 0 : i32
    return %c0_i32, %arg0, %arg1, %c0_i32_0 : i32, i32, i32, i32
  }
}

</mosaic_0001>

<llo_original>
// kernel: tpu_custom_call.1
$region0: #{tpu_custom_call.1}
  #allocation0 [shape = 'u32[]', space=smem, size = 0x4, offset = 0x4, fixed_abs, tag = 'smem constant byte address 0x4 - core index']
  #allocation1 [shape = 'u32[72,128]{1,0:T(1,128)}', space=vmem, size = 0x9000, scoped, tag = 'internal scratch']
  #allocation2 [shape = 'f32[4,8,8]{2,1,0:T(8,128)}', space=vmem, size = 0x4000, scoped, tag = 'scratch operand']
  #allocation3 [shape = 'f32[4,8,8]{2,1,0:T(8,128)}', space=vmem, size = 0x4000, scoped, tag = 'scratch operand']
  %s0 = inlined_call_operand.vmem [shape: f32[2,8,32], index: 0, kind: input, shape index: {}]
  %s1 = inlined_call_operand.vmem [shape: f32[2,8,32], index: 1, kind: input, shape index: {}]
  %s2 = inlined_call_operand.vmem [shape: f32[2,8,32], index: 2, kind: input, shape index: {}]
  %s3 = inlined_call_operand.vmem [shape: f32[4,32,8], index: 3, kind: input, shape index: {}]
  %s4 = inlined_call_operand.vmem [shape: f32[4,1,8], index: 4, kind: input, shape index: {}]
  %s5 = inlined_call_operand.vmem [shape: f32[4,32,8], index: 5, kind: input, shape index: {}]
  %s6 = inlined_call_operand.vmem [shape: f32[4,1,8], index: 6, kind: input, shape index: {}]
  %s7 = inlined_call_operand.vmem [shape: f32[4,32,8], index: 7, kind: input, shape index: {}]
  %s8 = inlined_call_operand.vmem [shape: f32[4,1,8], index: 8, kind: input, shape index: {}]
  %s9 = inlined_call_operand.vmem [shape: f32[4,8,32], index: 9, kind: input, shape index: {}]
  %s10 = inlined_call_operand.vmem [shape: f32[1,32], index: 10, kind: input, shape index: {}]
  %s11 = inlined_call_operand.vmem [shape: f32[1,32], index: 11, kind: input, shape index: {}]
  %s12 = inlined_call_operand.vmem [shape: f32[1,32], index: 12, kind: input, shape index: {}]
  %s13 = inlined_call_operand.hbm [shape: f32[2,8,32], index: 13, kind: output, shape index: {0}]
  %s14 = inlined_call_operand.hbm [shape: f32[4,2,8,8], index: 14, kind: output, shape index: {1}]
  %15 = xla_tuple %s13, %s14
  %s16 = sld [smem:[#allocation0]]
  $region111: #{tpu_custom_call.1} parent=0
    _
  %s18 = ssub.s32 1, %s16
  %s19 = scalar_select 0, %s18, %s16
  $region1: #{tpu_custom_call.1} parent=0
    #allocation4 [shape = 'u8[8192]{0}', space=vmem, size = 0x2000, scoped, tag = 'output window, operand 0']
    #allocation5 [shape = 's32[2]{0}', space=sflag, size = 0x8, scoped, tag = 'scoped memory for tpu_custom_call.1']
    #allocation6 [shape = 'u8[32768]{0}', space=vmem, size = 0x8000, scoped, tag = 'output window, operand 1']
    #allocation7 [shape = 's32[2]{0}', space=sflag, size = 0x8, scoped, tag = 'scoped memory for tpu_custom_call.1']
    %20 = vsyncpa [#allocation5], 0
    %s21 = scalar_lea.sflag [#allocation5], 1
    %22 = vsyncpa %s21, 0
    %23 = vsyncpa [#allocation7], 0
    %s24 = scalar_lea.sflag [#allocation7], 1
    %25 = vsyncpa %s24, 0
    loop: start=0, step=1, limit=4
    $region2: #{tpu_custom_call.1} parent=1 // loop_pre_header
      _
    $region3: #{tpu_custom_call.1} parent=1 // loop_header
      %s27 = sphi 0, %s31
      %p28 = scmp.ge.s32.totalorder %s27, 4
      %s34 = sphi 0, %s46
      %s35 = sphi 0, %s42
      %s36 = sphi 0, %s34
      %s37 = sphi 0, %s35
      %s38 = sphi 0, %s36
      %s39 = sphi 0, %s37
      %s51 = sphi 0, %s53
      %s54 = sphi 0, %s51
      %s55 = sphi 0, %s54
      %s71 = sphi 0, %s55
      %s77 = sphi 0, %s79
      %s80 = sphi 0, %s77
      %s81 = sphi 0, %s80
      %s97 = sphi 0, %s81
      %s103 = sphi 0, %s105
      %s106 = sphi 0, %s103
      %s107 = sphi 0, %s106
      %s123 = sphi 0, %s107
      %s127 = sphi 0, %s127
      %s129 = sphi 0, %s127
      %s130 = sphi 0, %s129
      %s144 = sphi 0, %s130
      %s148 = sphi 0, %s148
      %s150 = sphi 0, %s148
      %s151 = sphi 0, %s150
      %s165 = sphi 0, %s151
      %s169 = sphi 0, %s169
      %s171 = sphi 0, %s169
      %s172 = sphi 0, %s171
      %s186 = sphi 0, %s172
      %s190 = sphi 0, %s190
      %s192 = sphi 0, %s190
      %s193 = sphi 0, %s192
      %s207 = sphi 0, %s193
      %s211 = sphi 0, %s211
      %s213 = sphi 0, %s211
      %s214 = sphi 0, %s213
      %s228 = sphi 0, %s214
      %s232 = sphi 0, %s232
      %s234 = sphi 0, %s232
      %s235 = sphi 0, %s234
      %s249 = sphi 0, %s235
      %s253 = sphi 0, %s253
      %s255 = sphi 0, %s253
      %s256 = sphi 0, %s255
      %s270 = sphi 0, %s256
      %s274 = sphi 0, %s274
      %s276 = sphi 0, %s274
      %s277 = sphi 0, %s276
      %s291 = sphi 0, %s277
      %s295 = sphi 0, %s295
      %s297 = sphi 0, %s295
      %s298 = sphi 0, %s297
      %s312 = sphi 0, %s298
      %s316 = sphi 0, %s316
      %s318 = sphi 0, %s316
      %s319 = sphi 0, %s318
      %s333 = sphi 0, %s319
      %s341 = sphi 0, %s343
      %s344 = sphi 0, %s341
      %s345 = sphi 0, %s344
      %s361 = sphi 0, %s345
      %s369 = sphi 0, %s371
      %s372 = sphi 0, %s369
      %s373 = sphi 0, %s372
      %s389 = sphi 0, %s373
    $region4: #{tpu_custom_call.1} parent=1 // loop_header_branch
      %30 = sbr.rel (%p28) target = $region8
    $region5: #{tpu_custom_call.1} parent=1 // loop_body
      %s32 = ssub.s32 %s27, 1
      %s33 = ssub.s32 %s27, 2
      %s40 = sadd.s32 1, %s35
      %p41 = scmp.ge.s32.totalorder %s40, 1
      %s42 = scalar_select %p41, 0, %s40
      %s43 = sadd.s32 1, %s34
      %s44 = scalar_select %p41, %s43, %s34
      %p45 = scmp.ge.s32.totalorder %s44, 2
      %s46 = scalar_select %p45, 0, %s44
      %s47 = ssub.s32 %s34, %s46
      %s48 = ssub.s32 %s35, %s42
      %s49 = sor.u32 %s47, %s48
      %p50 = scmp.eq.s32.totalorder %s49, 0
      %s52 = sadd.s32 %s51, 1
      %s53 = scalar_select %p50, %s51, %s52
      %p56 = pneg %p50
      %p57 = scmp.eq.s32.totalorder %s27, 1
      %p58 = por %p56, %p57
      %p59 = scmp.ne.s32.totalorder %s51, %s54
      %p60 = scmp.eq.s32.totalorder %s27, 0
      %p61 = por %p59, %p60
      %p62 = scmp.ne.s32.totalorder %s51, %s54
      %p63 = scmp.eq.s32.totalorder %s32, 1
      %p64 = por %p62, %p63
      %p65 = scmp.ne.s32.totalorder %s54, %s55
      %p66 = scmp.eq.s32.totalorder %s32, 0
      %p67 = por %p65, %p66
      %p68 = scmp.ne.s32.totalorder %s54, %s55
      %p69 = scmp.eq.s32.totalorder %s33, 1
      %p70 = por %p68, %p69
      %p72 = scmp.ne.s32.totalorder %s55, %s71
      %p73 = scmp.eq.s32.totalorder %s33, 0
      %p74 = por %p72, %p73
      %s75 = ssub.s32 %s34, %s46
      %p76 = scmp.eq.s32.totalorder %s75, 0
      %s78 = sadd.s32 %s77, 1
      %s79 = scalar_select %p76, %s77, %s78
      %p82 = pneg %p76
      %p83 = scmp.eq.s32.totalorder %s27, 1
      %p84 = por %p82, %p83
      %p85 = scmp.ne.s32.totalorder %s77, %s80
      %p86 = scmp.eq.s32.totalorder %s27, 0
      %p87 = por %p85, %p86
      %p88 = scmp.ne.s32.totalorder %s77, %s80
      %p89 = scmp.eq.s32.totalorder %s32, 1
      %p90 = por %p88, %p89
      %p91 = scmp.ne.s32.totalorder %s80, %s81
      %p92 = scmp.eq.s32.totalorder %s32, 0
      %p93 = por %p91, %p92
      %p94 = scmp.ne.s32.totalorder %s80, %s81
      %p95 = scmp.eq.s32.totalorder %s33, 1
      %p96 = por %p94, %p95
      %p98 = scmp.ne.s32.totalorder %s81, %s97
      %p99 = scmp.eq.s32.totalorder %s33, 0
      %p100 = por %p98, %p99
      %s101 = ssub.s32 %s34, %s46
      %p102 = scmp.eq.s32.totalorder %s101, 0
      %s104 = sadd.s32 %s103, 1
      %s105 = scalar_select %p102, %s103, %s104
      %p108 = pneg %p102
      %p109 = scmp.eq.s32.totalorder %s27, 1
      %p110 = por %p108, %p109
      %p111 = scmp.ne.s32.totalorder %s103, %s106
      %p112 = scmp.eq.s32.totalorder %s27, 0
      %p113 = por %p111, %p112
      %p114 = scmp.ne.s32.totalorder %s103, %s106
      %p115 = scmp.eq.s32.totalorder %s32, 1
      %p116 = por %p114, %p115
      %p117 = scmp.ne.s32.totalorder %s106, %s107
      %p118 = scmp.eq.s32.totalorder %s32, 0
      %p119 = por %p117, %p118
      %p120 = scmp.ne.s32.totalorder %s106, %s107
      %p121 = scmp.eq.s32.totalorder %s33, 1
      %p122 = por %p120, %p121
      %p124 = scmp.ne.s32.totalorder %s107, %s123
      %p125 = scmp.eq.s32.totalorder %s33, 0
      %p126 = por %p124, %p125
      %s128 = sadd.s32 %s127, 1
      %p131 = scmp.eq.s32.totalorder %s27, 1
      %p132 = scmp.ne.s32.totalorder %s127, %s129
      %p133 = scmp.eq.s32.totalorder %s27, 0
      %p134 = por %p132, %p133
      %p135 = scmp.ne.s32.totalorder %s127, %s129
      %p136 = scmp.eq.s32.totalorder %s32, 1
      %p137 = por %p135, %p136
      %p138 = scmp.ne.s32.totalorder %s129, %s130
      %p139 = scmp.eq.s32.totalorder %s32, 0
      %p140 = por %p138, %p139
      %p141 = scmp.ne.s32.totalorder %s129, %s130
      %p142 = scmp.eq.s32.totalorder %s33, 1
      %p143 = por %p141, %p142
      %p145 = scmp.ne.s32.totalorder %s130, %s144
      %p146 = scmp.eq.s32.totalorder %s33, 0
      %p147 = por %p145, %p146
      %s149 = sadd.s32 %s148, 1
      %p152 = scmp.eq.s32.totalorder %s27, 1
      %p153 = scmp.ne.s32.totalorder %s148, %s150
      %p154 = scmp.eq.s32.totalorder %s27, 0
      %p155 = por %p153, %p154
      %p156 = scmp.ne.s32.totalorder %s148, %s150
      %p157 = scmp.eq.s32.totalorder %s32, 1
      %p158 = por %p156, %p157
      %p159 = scmp.ne.s32.totalorder %s150, %s151
      %p160 = scmp.eq.s32.totalorder %s32, 0
      %p161 = por %p159, %p160
      %p162 = scmp.ne.s32.totalorder %s150, %s151
      %p163 = scmp.eq.s32.totalorder %s33, 1
      %p164 = por %p162, %p163
      %p166 = scmp.ne.s32.totalorder %s151, %s165
      %p167 = scmp.eq.s32.totalorder %s33, 0
      %p168 = por %p166, %p167
      %s170 = sadd.s32 %s169, 1
      %p173 = scmp.eq.s32.totalorder %s27, 1
      %p174 = scmp.ne.s32.totalorder %s169, %s171
      %p175 = scmp.eq.s32.totalorder %s27, 0
      %p176 = por %p174, %p175
      %p177 = scmp.ne.s32.totalorder %s169, %s171
      %p178 = scmp.eq.s32.totalorder %s32, 1
      %p179 = por %p177, %p178
      %p180 = scmp.ne.s32.totalorder %s171, %s172
      %p181 = scmp.eq.s32.totalorder %s32, 0
      %p182 = por %p180, %p181
      %p183 = scmp.ne.s32.totalorder %s171, %s172
      %p184 = scmp.eq.s32.totalorder %s33, 1
      %p185 = por %p183, %p184
      %p187 = scmp.ne.s32.totalorder %s172, %s186
      %p188 = scmp.eq.s32.totalorder %s33, 0
      %p189 = por %p187, %p188
      %s191 = sadd.s32 %s190, 1
      %p194 = scmp.eq.s32.totalorder %s27, 1
      %p195 = scmp.ne.s32.totalorder %s190, %s192
      %p196 = scmp.eq.s32.totalorder %s27, 0
      %p197 = por %p195, %p196
      %p198 = scmp.ne.s32.totalorder %s190, %s192
      %p199 = scmp.eq.s32.totalorder %s32, 1
      %p200 = por %p198, %p199
      %p201 = scmp.ne.s32.totalorder %s192, %s193
      %p202 = scmp.eq.s32.totalorder %s32, 0
      %p203 = por %p201, %p202
      %p204 = scmp.ne.s32.totalorder %s192, %s193
      %p205 = scmp.eq.s32.totalorder %s33, 1
      %p206 = por %p204, %p205
      %p208 = scmp.ne.s32.totalorder %s193, %s207
      %p209 = scmp.eq.s32.totalorder %s33, 0
      %p210 = por %p208, %p209
      %s212 = sadd.s32 %s211, 1
      %p215 = scmp.eq.s32.totalorder %s27, 1
      %p216 = scmp.ne.s32.totalorder %s211, %s213
      %p217 = scmp.eq.s32.totalorder %s27, 0
      %p218 = por %p216, %p217
      %p219 = scmp.ne.s32.totalorder %s211, %s213
      %p220 = scmp.eq.s32.totalorder %s32, 1
      %p221 = por %p219, %p220
      %p222 = scmp.ne.s32.totalorder %s213, %s214
      %p223 = scmp.eq.s32.totalorder %s32, 0
      %p224 = por %p222, %p223
      %p225 = scmp.ne.s32.totalorder %s213, %s214
      %p226 = scmp.eq.s32.totalorder %s33, 1
      %p227 = por %p225, %p226
      %p229 = scmp.ne.s32.totalorder %s214, %s228
      %p230 = scmp.eq.s32.totalorder %s33, 0
      %p231 = por %p229, %p230
      %s233 = sadd.s32 %s232, 1
      %p236 = scmp.eq.s32.totalorder %s27, 1
      %p237 = scmp.ne.s32.totalorder %s232, %s234
      %p238 = scmp.eq.s32.totalorder %s27, 0
      %p239 = por %p237, %p238
      %p240 = scmp.ne.s32.totalorder %s232, %s234
      %p241 = scmp.eq.s32.totalorder %s32, 1
      %p242 = por %p240, %p241
      %p243 = scmp.ne.s32.totalorder %s234, %s235
      %p244 = scmp.eq.s32.totalorder %s32, 0
      %p245 = por %p243, %p244
      %p246 = scmp.ne.s32.totalorder %s234, %s235
      %p247 = scmp.eq.s32.totalorder %s33, 1
      %p248 = por %p246, %p247
      %p250 = scmp.ne.s32.totalorder %s235, %s249
      %p251 = scmp.eq.s32.totalorder %s33, 0
      %p252 = por %p250, %p251
      %s254 = sadd.s32 %s253, 1
      %p257 = scmp.eq.s32.totalorder %s27, 1
      %p258 = scmp.ne.s32.totalorder %s253, %s255
      %p259 = scmp.eq.s32.totalorder %s27, 0
      %p260 = por %p258, %p259
      %p261 = scmp.ne.s32.totalorder %s253, %s255
      %p262 = scmp.eq.s32.totalorder %s32, 1
      %p263 = por %p261, %p262
      %p264 = scmp.ne.s32.totalorder %s255, %s256
      %p265 = scmp.eq.s32.totalorder %s32, 0
      %p266 = por %p264, %p265
      %p267 = scmp.ne.s32.totalorder %s255, %s256
      %p268 = scmp.eq.s32.totalorder %s33, 1
      %p269 = por %p267, %p268
      %p271 = scmp.ne.s32.totalorder %s256, %s270
      %p272 = scmp.eq.s32.totalorder %s33, 0
      %p273 = por %p271, %p272
      %s275 = sadd.s32 %s274, 1
      %p278 = scmp.eq.s32.totalorder %s27, 1
      %p279 = scmp.ne.s32.totalorder %s274, %s276
      %p280 = scmp.eq.s32.totalorder %s27, 0
      %p281 = por %p279, %p280
      %p282 = scmp.ne.s32.totalorder %s274, %s276
      %p283 = scmp.eq.s32.totalorder %s32, 1
      %p284 = por %p282, %p283
      %p285 = scmp.ne.s32.totalorder %s276, %s277
      %p286 = scmp.eq.s32.totalorder %s32, 0
      %p287 = por %p285, %p286
      %p288 = scmp.ne.s32.totalorder %s276, %s277
      %p289 = scmp.eq.s32.totalorder %s33, 1
      %p290 = por %p288, %p289
      %p292 = scmp.ne.s32.totalorder %s277, %s291
      %p293 = scmp.eq.s32.totalorder %s33, 0
      %p294 = por %p292, %p293
      %s296 = sadd.s32 %s295, 1
      %p299 = scmp.eq.s32.totalorder %s27, 1
      %p300 = scmp.ne.s32.totalorder %s295, %s297
      %p301 = scmp.eq.s32.totalorder %s27, 0
      %p302 = por %p300, %p301
      %p303 = scmp.ne.s32.totalorder %s295, %s297
      %p304 = scmp.eq.s32.totalorder %s32, 1
      %p305 = por %p303, %p304
      %p306 = scmp.ne.s32.totalorder %s297, %s298
      %p307 = scmp.eq.s32.totalorder %s32, 0
      %p308 = por %p306, %p307
      %p309 = scmp.ne.s32.totalorder %s297, %s298
      %p310 = scmp.eq.s32.totalorder %s33, 1
      %p311 = por %p309, %p310
      %p313 = scmp.ne.s32.totalorder %s298, %s312
      %p314 = scmp.eq.s32.totalorder %s33, 0
      %p315 = por %p313, %p314
      %s317 = sadd.s32 %s316, 1
      %p320 = scmp.eq.s32.totalorder %s27, 1
      %p321 = scmp.ne.s32.totalorder %s316, %s318
      %p322 = scmp.eq.s32.totalorder %s27, 0
      %p323 = por %p321, %p322
      %p324 = scmp.ne.s32.totalorder %s316, %s318
      %p325 = scmp.eq.s32.totalorder %s32, 1
      %p326 = por %p324, %p325
      %p327 = scmp.ne.s32.totalorder %s318, %s319
      %p328 = scmp.eq.s32.totalorder %s32, 0
      %p329 = por %p327, %p328
      %p330 = scmp.ne.s32.totalorder %s318, %s319
      %p331 = scmp.eq.s32.totalorder %s33, 1
      %p332 = por %p330, %p331
      %p334 = scmp.ne.s32.totalorder %s319, %s333
      %p335 = scmp.eq.s32.totalorder %s33, 0
      %p336 = por %p334, %p335
      %s337 = ssub.s32 %s34, %s46
      %s338 = ssub.s32 %s35, %s42
      %s339 = sor.u32 %s337, %s338
      %p340 = scmp.eq.s32.totalorder %s339, 0
      %s342 = sadd.s32 %s341, 1
      %s343 = scalar_select %p340, %s341, %s342
      %p346 = pneg %p340
      %p347 = scmp.eq.s32.totalorder %s27, 1
      %p348 = por %p346, %p347
      %p349 = scmp.ne.s32.totalorder %s341, %s344
      %p350 = scmp.eq.s32.totalorder %s27, 0
      %p351 = por %p349, %p350
      %p352 = scmp.ne.s32.totalorder %s341, %s344
      %p353 = scmp.eq.s32.totalorder %s32, 1
      %p354 = por %p352, %p353
      %p355 = scmp.ne.s32.totalorder %s344, %s345
      %p356 = scmp.eq.s32.totalorder %s32, 0
      %p357 = por %p355, %p356
      %p358 = scmp.ne.s32.totalorder %s344, %s345
      %p359 = scmp.eq.s32.totalorder %s33, 1
      %p360 = por %p358, %p359
      %p362 = scmp.ne.s32.totalorder %s345, %s361
      %p363 = scmp.eq.s32.totalorder %s33, 0
      %p364 = por %p362, %p363
      %s365 = ssub.s32 %s34, %s46
      %s366 = ssub.s32 %s35, %s42
      %s367 = sor.u32 %s365, %s366
      %p368 = scmp.eq.s32.totalorder %s367, 0
      %s370 = sadd.s32 %s369, 1
      %s371 = scalar_select %p368, %s369, %s370
      %p374 = pneg %p368
      %p375 = scmp.eq.s32.totalorder %s27, 1
      %p376 = por %p374, %p375
      %p377 = scmp.ne.s32.totalorder %s369, %s372
      %p378 = scmp.eq.s32.totalorder %s27, 0
      %p379 = por %p377, %p378
      %p380 = scmp.ne.s32.totalorder %s369, %s372
      %p381 = scmp.eq.s32.totalorder %s32, 1
      %p382 = por %p380, %p381
      %p383 = scmp.ne.s32.totalorder %s372, %s373
      %p384 = scmp.eq.s32.totalorder %s32, 0
      %p385 = por %p383, %p384
      %p386 = scmp.ne.s32.totalorder %s372, %s373
      %p387 = scmp.eq.s32.totalorder %s33, 1
      %p388 = por %p386, %p387
      %p390 = scmp.ne.s32.totalorder %s373, %s389
      %p391 = scmp.eq.s32.totalorder %s33, 0
      %p392 = por %p390, %p391
      %p393 = scmp.le.s32.totalorder 1, %s27
      %p394 = scmp.lt.s32.totalorder %s27, 3
      %p395 = pnand %p393, %p394
      %p396 = pneg %p395
      // Predicated region
      $region9: #{tpu_custom_call.1} parent=5 // pred_check
        _
      $region10: #{tpu_custom_call.1} parent=5 // pred_check_branch
        %398 = sbr.rel (%p395) target = $region12
      $region11: #{tpu_custom_call.1} parent=5 // pred_region
        %s399 = ssub.s32 %s27, 1
        // Predicated region
        $region13: #{tpu_custom_call.1} parent=11 // pred_check
          %p400 = pneg %p140
        $region14: #{tpu_custom_call.1} parent=11 // pred_check_branch
          %402 = sbr.rel (%p400) target = $region16
        $region15: #{tpu_custom_call.1} parent=11 // pred_region
          _
        $region16: #{tpu_custom_call.1} parent=11 // pred_fallthru
          _
        // Predicated region
        $region17: #{tpu_custom_call.1} parent=11 // pred_check
          %p403 = pneg %p161
        $region18: #{tpu_custom_call.1} parent=11 // pred_check_branch
          %405 = sbr.rel (%p403) target = $region20
        $region19: #{tpu_custom_call.1} parent=11 // pred_region
          _
        $region20: #{tpu_custom_call.1} parent=11 // pred_fallthru
          _
        // Predicated region
        $region21: #{tpu_custom_call.1} parent=11 // pred_check
          %p406 = pneg %p182
        $region22: #{tpu_custom_call.1} parent=11 // pred_check_branch
          %408 = sbr.rel (%p406) target = $region24
        $region23: #{tpu_custom_call.1} parent=11 // pred_region
          _
        $region24: #{tpu_custom_call.1} parent=11 // pred_fallthru
          _
        // Predicated region
        $region25: #{tpu_custom_call.1} parent=11 // pred_check
          %p409 = pneg %p203
        $region26: #{tpu_custom_call.1} parent=11 // pred_check_branch
          %411 = sbr.rel (%p409) target = $region28
        $region27: #{tpu_custom_call.1} parent=11 // pred_region
          _
        $region28: #{tpu_custom_call.1} parent=11 // pred_fallthru
          _
        // Predicated region
        $region29: #{tpu_custom_call.1} parent=11 // pred_check
          %p412 = pneg %p224
        $region30: #{tpu_custom_call.1} parent=11 // pred_check_branch
          %414 = sbr.rel (%p412) target = $region32
        $region31: #{tpu_custom_call.1} parent=11 // pred_region
          _
        $region32: #{tpu_custom_call.1} parent=11 // pred_fallthru
          _
        // Predicated region
        $region33: #{tpu_custom_call.1} parent=11 // pred_check
          %p415 = pneg %p245
        $region34: #{tpu_custom_call.1} parent=11 // pred_check_branch
          %417 = sbr.rel (%p415) target = $region36
        $region35: #{tpu_custom_call.1} parent=11 // pred_region
          _
        $region36: #{tpu_custom_call.1} parent=11 // pred_fallthru
          _
        // Predicated region
        $region37: #{tpu_custom_call.1} parent=11 // pred_check
          %p418 = pneg %p266
        $region38: #{tpu_custom_call.1} parent=11 // pred_check_branch
          %420 = sbr.rel (%p418) target = $region40
        $region39: #{tpu_custom_call.1} parent=11 // pred_region
          _
        $region40: #{tpu_custom_call.1} parent=11 // pred_fallthru
          _
        // Predicated region
        $region41: #{tpu_custom_call.1} parent=11 // pred_check
          %p421 = pneg %p287
        $region42: #{tpu_custom_call.1} parent=11 // pred_check_branch
          %423 = sbr.rel (%p421) target = $region44
        $region43: #{tpu_custom_call.1} parent=11 // pred_region
          _
        $region44: #{tpu_custom_call.1} parent=11 // pred_fallthru
          _
        // Predicated region
        $region45: #{tpu_custom_call.1} parent=11 // pred_check
          %p424 = pneg %p308
        $region46: #{tpu_custom_call.1} parent=11 // pred_check_branch
          %426 = sbr.rel (%p424) target = $region48
        $region47: #{tpu_custom_call.1} parent=11 // pred_region
          _
        $region48: #{tpu_custom_call.1} parent=11 // pred_fallthru
          _
        // Predicated region
        $region49: #{tpu_custom_call.1} parent=11 // pred_check
          %p427 = pneg %p329
        $region50: #{tpu_custom_call.1} parent=11 // pred_check_branch
          %429 = sbr.rel (%p427) target = $region52
        $region51: #{tpu_custom_call.1} parent=11 // pred_region
          _
        $region52: #{tpu_custom_call.1} parent=11 // pred_fallthru
          _
      $region12: #{tpu_custom_call.1} parent=5 // pred_fallthru
        _
      %p430 = scmp.lt.s32.totalorder %s27, 2
      // Predicated region
      $region53: #{tpu_custom_call.1} parent=5 // pred_check
        %p431 = pneg %p430
      $region54: #{tpu_custom_call.1} parent=5 // pred_check_branch
        %433 = sbr.rel (%p431) target = $region56
      $region55: #{tpu_custom_call.1} parent=5 // pred_region
        // Predicated region
        $region57: #{tpu_custom_call.1} parent=55 // pred_check
          %p434 = pneg %p61
        $region58: #{tpu_custom_call.1} parent=55 // pred_check_branch
          %436 = sbr.rel (%p434) target = $region60
        $region59: #{tpu_custom_call.1} parent=55 // pred_region
          %p437 = scmp.lt.s32.totalorder %s34, 1
          %s438 = scalar_select %p437, %s34, 1
          %p439 = scmp.lt.s32.totalorder %s35, 0
          %s440 = scalar_select %p439, %s35, 0
          %s441 = sadd.s32 %s440, %s438
          %s442 = smul.addr %s441, 8
          %s443 = scalar_lea.vmem %s0, %s442
        $region60: #{tpu_custom_call.1} parent=55 // pred_fallthru
          _
        // Predicated region
        $region61: #{tpu_custom_call.1} parent=55 // pred_check
          %p444 = pneg %p87
        $region62: #{tpu_custom_call.1} parent=55 // pred_check_branch
          %446 = sbr.rel (%p444) target = $region64
        $region63: #{tpu_custom_call.1} parent=55 // pred_region
          %p447 = scmp.lt.s32.totalorder %s34, 1
          %s448 = scalar_select %p447, %s34, 1
          %s449 = smul.addr %s448, 8
          %s450 = scalar_lea.vmem %s1, %s449
        $region64: #{tpu_custom_call.1} parent=55 // pred_fallthru
          _
        // Predicated region
        $region65: #{tpu_custom_call.1} parent=55 // pred_check
          %p451 = pneg %p113
        $region66: #{tpu_custom_call.1} parent=55 // pred_check_branch
          %453 = sbr.rel (%p451) target = $region68
        $region67: #{tpu_custom_call.1} parent=55 // pred_region
          %p454 = scmp.lt.s32.totalorder %s34, 1
          %s455 = scalar_select %p454, %s34, 1
          %s456 = smul.addr %s455, 8
          %s457 = scalar_lea.vmem %s2, %s456
        $region68: #{tpu_custom_call.1} parent=55 // pred_fallthru
          _
      $region56: #{tpu_custom_call.1} parent=5 // pred_fallthru
        _
      %p458 = scmp.le.s32.totalorder 1, %s27
      %p459 = scmp.lt.s32.totalorder %s27, 3
      %p460 = pnand %p458, %p459
      %p461 = pneg %p460
      // Predicated region
      $region69: #{tpu_custom_call.1} parent=5 // pred_check
        _
      $region70: #{tpu_custom_call.1} parent=5 // pred_check_branch
        %463 = sbr.rel (%p460) target = $region72
      $region71: #{tpu_custom_call.1} parent=5 // pred_region
        %s464 = ssub.s32 %s27, 1
        %p465 = scmp.lt.s32.totalorder %s36, 1
        %s466 = scalar_select %p465, %s36, 1
        %p467 = scmp.lt.s32.totalorder %s37, 0
        %s468 = scalar_select %p467, %s37, 0
        %s469 = sadd.s32 %s468, %s466
        %s470 = smul.addr %s469, 8
        %s471 = scalar_lea.vmem %s0, %s470
        %p472 = pneg %p67
        %p473 = pneg %p64
        %p474 = scmp.lt.s32.totalorder %s36, 1
        %s475 = scalar_select %p474, %s36, 1
        %s476 = smul.addr %s475, 8
        %s477 = scalar_lea.vmem %s1, %s476
        %p478 = pneg %p93
        %p479 = pneg %p90
        %p480 = scmp.lt.s32.totalorder %s36, 1
        %s481 = scalar_select %p480, %s36, 1
        %s482 = smul.addr %s481, 8
        %s483 = scalar_lea.vmem %s2, %s482
        %p484 = pneg %p119
        %p485 = pneg %p116
        %p486 = pneg %p140
        %p487 = pneg %p137
        %p488 = pneg %p161
        %p489 = pneg %p158
        %p490 = pneg %p182
        %p491 = pneg %p179
        %p492 = pneg %p203
        %p493 = pneg %p200
        %p494 = pneg %p224
        %p495 = pneg %p221
        %p496 = pneg %p245
        %p497 = pneg %p242
        %p498 = pneg %p266
        %p499 = pneg %p263
        %p500 = pneg %p287
        %p501 = pneg %p284
        %p502 = pneg %p308
        %p503 = pneg %p305
        %p504 = pneg %p329
        %p505 = pneg %p326
        %p506 = pneg %p357
        %p507 = pneg %p354
        %s508 = sand.u32 %s344, 1
        %s509 = scalar_lea.sflag [#allocation5], %s508
        %s510 = sand.u32 %s344, 1
        %s511 = smul.addr %s510, 8
        %s512 = scalar_lea.vmem [#allocation4], %s511
        %p513 = pneg %p385
        %p514 = pneg %p382
        %s515 = sand.u32 %s372, 1
        %s516 = scalar_lea.sflag [#allocation7], %s515
        %s517 = sand.u32 %s372, 1
        %s518 = smul.addr %s517, 32
        %s519 = scalar_lea.vmem [#allocation6], %s518
        %p520 = scmp.lt.s32.totalorder %s36, 1
        %s521 = scalar_select %p520, %s36, 1
        %p522 = scmp.lt.s32.totalorder %s37, 0
        %s523 = scalar_select %p522, %s37, 0
        %s524 = sadd.s32 %s523, %s521
        %s525 = smul.addr %s524, 8
        %s526 = scalar_lea.vmem %s0, %s525
        %p527 = scmp.lt.s32.totalorder %s36, 1
        %s528 = scalar_select %p527, %s36, 1
        %s529 = smul.addr %s528, 8
        %s530 = scalar_lea.vmem %s1, %s529
        %p531 = scmp.lt.s32.totalorder %s36, 1
        %s532 = scalar_select %p531, %s36, 1
        %s533 = smul.addr %s532, 8
        %s534 = scalar_lea.vmem %s2, %s533
        %p535 = scmp.eq.s32.totalorder %s37, 0
        // Predicated region
        $region73: #{tpu_custom_call.1} parent=71 // pred_check
          %p536 = pneg %p535
        $region74: #{tpu_custom_call.1} parent=71 // pred_check_branch
          %538 = sbr.rel (%p536) target = $region76
        $region75: #{tpu_custom_call.1} parent=71 // pred_region
          %v539 = vld [vmem:[%s530] sm:$0xff]
          %v540 = vld [vmem:[%s534] sm:$0xff]
          loop: start=0, step=1, limit=4
          $region77: #{tpu_custom_call.1} parent=75 // loop_pre_header
            _
          $region78: #{tpu_custom_call.1} parent=75 // loop_header
            %s542 = sphi 0, %s546
            %p543 = scmp.ge.s32.totalorder %s542, 4
          $region79: #{tpu_custom_call.1} parent=75 // loop_header_branch
            %545 = sbr.rel (%p543) target = $region83
          $region80: #{tpu_custom_call.1} parent=75 // loop_body
            %s547 = smul.u32 %s542, 32
            %s548 = scalar_lea.vmem %s5, %s547
            %v549 = vld [vmem:[%s548] sm:$0xff]
            %v550 = vld [vmem:[%s548 + $0x8] sm:$0xff]
            %v551 = vld [vmem:[%s548 + $0x10] sm:$0xff]
            %v552 = vld [vmem:[%s548 + $0x18] sm:$0xff]
            %s553 = scalar_lea.vmem %s6, %s542
            %v554 = vld [vmem:[%s553] sm:$0x1]
            %v556 = vperm.slane %v554, 0
            %vm558 = vcmask 261120
            %v560 = vsel %vm558, %v539, 0
            %562 = vmatpush.msra.mxu0 0.0
            %563 = vmatpush.msra.mxu0 0.0
            %564 = vmatpush.msra.mxu0 0.0
            %565 = vmatpush.msra.mxu0 0.0
            %566 = vmatpush.msra.mxu0 0.0
            %567 = vmatpush.msra.mxu0 0.0
            %568 = vmatpush.msra.mxu0 0.0
            %569 = vmatpush.msra.mxu0 0.0
            %570 = vmatpush.msra.mxu0 0.0
            %571 = vmatpush.msra.mxu0 0.0
            %572 = vmatpush.msra.mxu0 0.0
            %573 = vmatpush.msra.mxu0 0.0
            %574 = vmatpush.msra.mxu0 %v552
            %575 = vmatpush.msra.mxu0 %v551
            %576 = vmatpush.msra.mxu0 %v550
            %577 = vmatpush.msra.mxu0 %v549
            %578 = vmatmul.f32.gmra.mxu0 %v560
            %v579 = vpop.f32.mrf.mxu0
            %v580 = vadd.f32 %v556, %v579
            %581 = vdwg.mxu0
            %582 = vxpose.xlu0.b32.start [1/16] %v580, 128
            %583 = vxpose.xlu0.b32.cont [2/16] 0.0, 128
            %584 = vxpose.xlu0.b32.cont [3/16] 0.0, 128
            %585 = vxpose.xlu0.b32.cont [4/16] 0.0, 128
            %586 = vxpose.xlu0.b32.cont [5/16] 0.0, 128
            %587 = vxpose.xlu0.b32.cont [6/16] 0.0, 128
            %588 = vxpose.xlu0.b32.cont [7/16] 0.0, 128
            %589 = vxpose.xlu0.b32.cont [8/16] 0.0, 128
            %590 = vxpose.xlu0.b32.cont [9/16] 0.0, 128
            %591 = vxpose.xlu0.b32.cont [10/16] 0.0, 128
            %592 = vxpose.xlu0.b32.cont [11/16] 0.0, 128
            %593 = vxpose.xlu0.b32.cont [12/16] 0.0, 128
            %594 = vxpose.xlu0.b32.cont [13/16] 0.0, 128
            %595 = vxpose.xlu0.b32.cont [14/16] 0.0, 128
            %596 = vxpose.xlu0.b32.cont [15/16] 0.0, 128
            %597 = vxpose.xlu0.b32.end [16/16] 0.0, 128
            %v598 = vpop.trf.xlu0
            %v599 = vpop.trf.xlu0
            %v600 = vpop.trf.xlu0
            %v601 = vpop.trf.xlu0
            %v602 = vpop.trf.xlu0
            %v603 = vpop.trf.xlu0
            %v604 = vpop.trf.xlu0
            %v605 = vpop.trf.xlu0
            %v606 = vpop.trf.xlu0
            %v607 = vpop.trf.xlu0
            %v608 = vpop.trf.xlu0
            %v609 = vpop.trf.xlu0
            %v610 = vpop.trf.xlu0
            %v611 = vpop.trf.xlu0
            %v612 = vpop.trf.xlu0
            %v613 = vpop.trf.xlu0
            %s614 = smul.u32 %s542, 8
            %s615 = scalar_lea.vmem [#allocation2], %s614
            %vm616 = vcmask 64512
            %617 = vst.msk [vmem:[%s615] sm:$0xff] %vm616, %v598
            %s618 = scalar_lea.vmem %s7, %s547
            %v619 = vld [vmem:[%s618] sm:$0xff]
            %v620 = vld [vmem:[%s618 + $0x8] sm:$0xff]
            %v621 = vld [vmem:[%s618 + $0x10] sm:$0xff]
            %v622 = vld [vmem:[%s618 + $0x18] sm:$0xff]
            %s623 = scalar_lea.vmem %s8, %s542
            %v624 = vld [vmem:[%s623] sm:$0x1]
            %v626 = vperm.slane %v624, 0
            %v629 = vsel %vm558, %v540, 0
            %631 = vmatpush.msra.mxu0 0.0
            %632 = vmatpush.msra.mxu0 0.0
            %633 = vmatpush.msra.mxu0 0.0
            %634 = vmatpush.msra.mxu0 0.0
            %635 = vmatpush.msra.mxu0 0.0
            %636 = vmatpush.msra.mxu0 0.0
            %637 = vmatpush.msra.mxu0 0.0
            %638 = vmatpush.msra.mxu0 0.0
            %639 = vmatpush.msra.mxu0 0.0
            %640 = vmatpush.msra.mxu0 0.0
            %641 = vmatpush.msra.mxu0 0.0
            %642 = vmatpush.msra.mxu0 0.0
            %643 = vmatpush.msra.mxu0 %v622
            %644 = vmatpush.msra.mxu0 %v621
            %645 = vmatpush.msra.mxu0 %v620
            %646 = vmatpush.msra.mxu0 %v619
            %647 = vmatmul.f32.gmra.mxu0 %v629
            %v648 = vpop.f32.mrf.mxu0
            %v649 = vadd.f32 %v626, %v648
            %650 = vdwg.mxu0
            %s651 = scalar_lea.vmem [#allocation3], %s614
            %652 = vst.msk [vmem:[%s651] sm:$0xff] %vm616, %v649
          $region81: #{tpu_custom_call.1} parent=75 // loop_footer
            %s546 = sadd.s32 1, %s542
          $region82: #{tpu_custom_call.1} parent=75 // loop_footer_branch
            %541 = sbr.rel target = $region78
          $region83: #{tpu_custom_call.1} parent=75 // loop_exit
            _
        $region76: #{tpu_custom_call.1} parent=71 // pred_fallthru
          _
        %v653 = vld [vmem:[%s526] sm:$0xff]
        loop: start=0, step=1, limit=4
        $region84: #{tpu_custom_call.1} parent=71 // loop_pre_header
          _
        $region85: #{tpu_custom_call.1} parent=71 // loop_header
          %s655 = sphi 0, %s659
          %p656 = scmp.ge.s32.totalorder %s655, 4
          %v660 = vphi 0.0, %v786
        $region86: #{tpu_custom_call.1} parent=71 // loop_header_branch
          %658 = sbr.rel (%p656) target = $region90
        $region87: #{tpu_custom_call.1} parent=71 // loop_body
          %s661 = smul.u32 %s655, 32
          %s662 = scalar_lea.vmem %s3, %s661
          %v663 = vld [vmem:[%s662] sm:$0xff]
          %v664 = vld [vmem:[%s662 + $0x8] sm:$0xff]
          %v665 = vld [vmem:[%s662 + $0x10] sm:$0xff]
          %v666 = vld [vmem:[%s662 + $0x18] sm:$0xff]
          %s667 = scalar_lea.vmem %s4, %s655
          %v668 = vld [vmem:[%s667] sm:$0x1]
          %v670 = vperm.slane %v668, 0
          %vm672 = vcmask 261120
          %v674 = vsel %vm672, %v653, 0
          %676 = vmatpush.msra.mxu0 0.0
          %677 = vmatpush.msra.mxu0 0.0
          %678 = vmatpush.msra.mxu0 0.0
          %679 = vmatpush.msra.mxu0 0.0
          %680 = vmatpush.msra.mxu0 0.0
          %681 = vmatpush.msra.mxu0 0.0
          %682 = vmatpush.msra.mxu0 0.0
          %683 = vmatpush.msra.mxu0 0.0
          %684 = vmatpush.msra.mxu0 0.0
          %685 = vmatpush.msra.mxu0 0.0
          %686 = vmatpush.msra.mxu0 0.0
          %687 = vmatpush.msra.mxu0 0.0
          %688 = vmatpush.msra.mxu0 %v666
          %689 = vmatpush.msra.mxu0 %v665
          %690 = vmatpush.msra.mxu0 %v664
          %691 = vmatpush.msra.mxu0 %v663
          %692 = vmatmul.f32.gmra.mxu0 %v674
          %v693 = vpop.f32.mrf.mxu0
          %v694 = vadd.f32 %v670, %v693
          %695 = vdwg.mxu0
          %s696 = smul.u32 %s655, 8
          %s697 = scalar_lea.vmem [#allocation2], %s696
          %v698 = vld [vmem:[%s697] sm:$0xff]
          %vm699 = vcmask 64512
          %v701 = vsel %vm699, %v694, 0
          %703 = vmatpush.msra.mxu0 0.0
          %704 = vmatpush.msra.mxu0 0.0
          %705 = vmatpush.msra.mxu0 0.0
          %706 = vmatpush.msra.mxu0 0.0
          %707 = vmatpush.msra.mxu0 0.0
          %708 = vmatpush.msra.mxu0 0.0
          %709 = vmatpush.msra.mxu0 0.0
          %710 = vmatpush.msra.mxu0 0.0
          %711 = vmatpush.msra.mxu0 0.0
          %712 = vmatpush.msra.mxu0 0.0
          %713 = vmatpush.msra.mxu0 0.0
          %714 = vmatpush.msra.mxu0 0.0
          %715 = vmatpush.msra.mxu0 0.0
          %716 = vmatpush.msra.mxu0 0.0
          %717 = vmatpush.msra.mxu0 0.0
          %718 = vmatpush.msra.mxu0 %v698
          %719 = vmatmul.f32.gmra.mxu0 %v701
          %v720 = vpop.f32.mrf.mxu0
          %v721 = vadd.f32 0.0, %v720
          %722 = vdwg.mxu0
          %v723 = vsel %vm699, %v721, -inf
          %724 = vmax.xlane.f32.xlu0 %v723
          %v725 = vpop.xlane.xlu0 %724
          %v726 = vsub.f32 %v721, %v725
          %v727 = vmul.f32 %v726, 1.442695
          %v728 = vpow.pop %v727
          %v729 = vsel %vm699, %v728, 0.0
          %730 = vadd.xlane.f32.xlu0 %v729
          %v731 = vpop.xlane.xlu0 %730
          %v732 = vrcp.pop %v731
          %v733 = vmul.f32 %v728, %v732
          %s734 = scalar_lea.vmem %s519, %s696 [#allocation6]
          %735 = vst.msk [vmem:[%s734] sm:$0xff] %vm699, %v733
          %s736 = scalar_lea.vmem [#allocation3], %s696
          %v737 = vld [vmem:[%s736] sm:$0xff]
          %v739 = vsel %vm699, %v733, 0
          %741 = vmatpush.msra.mxu0 0.0
          %742 = vmatpush.msra.mxu0 0.0
          %743 = vmatpush.msra.mxu0 0.0
          %744 = vmatpush.msra.mxu0 0.0
          %745 = vmatpush.msra.mxu0 0.0
          %746 = vmatpush.msra.mxu0 0.0
          %747 = vmatpush.msra.mxu0 0.0
          %748 = vmatpush.msra.mxu0 0.0
          %749 = vmatpush.msra.mxu0 0.0
          %750 = vmatpush.msra.mxu0 0.0
          %751 = vmatpush.msra.mxu0 0.0
          %752 = vmatpush.msra.mxu0 0.0
          %753 = vmatpush.msra.mxu0 0.0
          %754 = vmatpush.msra.mxu0 0.0
          %755 = vmatpush.msra.mxu0 0.0
          %756 = vmatpush.msra.mxu0 %v737
          %757 = vmatmul.f32.gmra.mxu0 %v739
          %v758 = vpop.f32.mrf.mxu0
          %v759 = vadd.f32 0.0, %v758
          %760 = vdwg.mxu0
          %s761 = scalar_lea.vmem %s9, %s696
          %v762 = vld [vmem:[%s761] sm:$0xff]
          %v764 = vsel %vm699, %v759, 0
          %766 = vmatpush.msra.mxu0 0.0
          %767 = vmatpush.msra.mxu0 0.0
          %768 = vmatpush.msra.mxu0 0.0
          %769 = vmatpush.msra.mxu0 0.0
          %770 = vmatpush.msra.mxu0 0.0
          %771 = vmatpush.msra.mxu0 0.0
          %772 = vmatpush.msra.mxu0 0.0
          %773 = vmatpush.msra.mxu0 0.0
          %774 = vmatpush.msra.mxu0 0.0
          %775 = vmatpush.msra.mxu0 0.0
          %776 = vmatpush.msra.mxu0 0.0
          %777 = vmatpush.msra.mxu0 0.0
          %778 = vmatpush.msra.mxu0 0.0
          %779 = vmatpush.msra.mxu0 0.0
          %780 = vmatpush.msra.mxu0 0.0
          %781 = vmatpush.msra.mxu0 %v762
          %782 = vmatmul.f32.gmra.mxu0 %v764
          %v783 = vpop.f32.mrf.mxu0
          %v784 = vadd.f32 0.0, %v783
          %785 = vdwg.mxu0
          %v786 = vadd.f32 %v660, %v784
        $region88: #{tpu_custom_call.1} parent=71 // loop_footer
          %s659 = sadd.s32 1, %s655
        $region89: #{tpu_custom_call.1} parent=71 // loop_footer_branch
          %654 = sbr.rel target = $region85
        $region90: #{tpu_custom_call.1} parent=71 // loop_exit
          _
        %v787 = vld [vmem:[%s10] sm:$0x1]
        %v789 = vperm.slane %v787, 0
        %v791 = vadd.f32 %v660, %v789
        %v792 = vadd.f32 %v791, %v653
        %vm793 = vcmask 261120
        %v794 = vsel %vm793, %v792, 0.0
        %795 = vadd.xlane.f32.xlu0 %v794
        %v796 = vpop.xlane.xlu0 %795
        %v797 = vrcp.pop 32.0
        %v798 = vmul.f32 32.0, %v797
        %v799 = vsub.f32 1.0, %v798
        %v800 = vmul.f32 %v797, %v799
        %v801 = vadd.f32 %v797, %v800
        %vm802 = vweird.f32 %v797
        %v803 = vsel %vm802, %v797, %v801
        %v804 = vmul.f32 %v796, %v803
        %v805 = vsub.f32 %v792, %v804
        %v806 = vmul.f32 %v805, %v805
        %v807 = vsel %vm793, %v806, 0.0
        %808 = vadd.xlane.f32.xlu0 %v807
        %v809 = vpop.xlane.xlu0 %808
        %v810 = vmul.f32 %v809, %v803
        %v811 = vadd.f32 %v810, 1e-05
        %v812 = vrsqrt.pop %v811
        %v813 = vmul.f32 %v812, %v811
        %v814 = vmul.f32 %v813, %v812
        %v815 = vmul.f32 0.5, %v814
        %v816 = vsub.f32 1.5, %v815
        %v817 = vmul.f32 %v812, %v816
        %vm818 = vweird.f32 %v811
        %vm819 = vweird.f32 %v812
        %vm820 = vmor %vm818, %vm819
        %v821 = vsel %vm820, %v812, %v817
        %v822 = vmul.f32 %v805, %v821
        %v823 = vld [vmem:[%s11] sm:$0x1]
        %v825 = vperm.slane %v823, 0
        %v827 = vmul.f32 %v822, %v825
        %v828 = vld [vmem:[%s12] sm:$0x1]
        %v830 = vperm.slane %v828, 0
        %v832 = vadd.f32 %v827, %v830
        %833 = vst.msk [vmem:[%s512] sm:$0xff] %vm793, %v832
        %s834 = sand.u32 %s344, 1
        %s835 = scalar_lea.sflag [#allocation5], %s834
        %s836 = sand.u32 %s344, 1
        %s837 = smul.addr %s836, 8
        %s838 = scalar_lea.vmem [#allocation4], %s837
        %s839 = sand.u32 %s372, 1
        %s840 = scalar_lea.sflag [#allocation7], %s839
        %s841 = sand.u32 %s372, 1
        %s842 = smul.addr %s841, 32
        %s843 = scalar_lea.vmem [#allocation6], %s842
        // Predicated region
        $region91: #{tpu_custom_call.1} parent=71 // pred_check
          %p844 = pneg %p354
        $region92: #{tpu_custom_call.1} parent=71 // pred_check_branch
          %846 = sbr.rel (%p844) target = $region94
        $region93: #{tpu_custom_call.1} parent=71 // pred_region
          %848 = vsyncadd %s835, 0
          %s849 = sadd.s32 %s37, %s36
          %s850 = smul.addr %s849, 8
          %s851 = scalar_lea.hbm %s13, %s850
          %s853 = sshll.u32 %s838, 4
          %s854 = int_to_ptr.vmem [resolvable:$true] %s853
          %s855 = sshll.u32 %s851, 4
          %s856 = int_to_ptr.hbm [resolvable:$true] %s855
          %858 = dma.vmem_to_hbm [thread:$0]  %s854, 128, %s856, %s835
        $region94: #{tpu_custom_call.1} parent=71 // pred_fallthru
          _
        // Predicated region
        $region95: #{tpu_custom_call.1} parent=71 // pred_check
          %p859 = pneg %p382
        $region96: #{tpu_custom_call.1} parent=71 // pred_check_branch
          %861 = sbr.rel (%p859) target = $region98
        $region97: #{tpu_custom_call.1} parent=71 // pred_region
          %863 = vsyncadd %s840, 0
          %s864 = sadd.s32 %s37, %s36
          %s865 = smul.addr %s864, 8
          %s866 = scalar_lea.hbm %s14, %s865
          %s867 = sshll.u32 %s843, 4
          %s868 = int_to_ptr.vmem [resolvable:$true] %s867
          %s869 = sshll.u32 %s866, 4
          %s870 = int_to_ptr.hbm [resolvable:$true] %s869
          %875 = dma.vmem_to_hbm [thread:$0]  %s868, 512, %s870, %s840, 128, 256, 8
        $region98: #{tpu_custom_call.1} parent=71 // pred_fallthru
          _
      $region72: #{tpu_custom_call.1} parent=5 // pred_fallthru
        _
      %p876 = scmp.le.s32.totalorder 2, %s27
      // Predicated region
      $region99: #{tpu_custom_call.1} parent=5 // pred_check
        %p877 = pneg %p876
      $region100: #{tpu_custom_call.1} parent=5 // pred_check_branch
        %879 = sbr.rel (%p877) target = $region102
      $region101: #{tpu_custom_call.1} parent=5 // pred_region
        %s880 = ssub.s32 %s27, 2
        // Predicated region
        $region103: #{tpu_custom_call.1} parent=101 // pred_check
          %p881 = pneg %p360
        $region104: #{tpu_custom_call.1} parent=101 // pred_check_branch
          %883 = sbr.rel (%p881) target = $region106
        $region105: #{tpu_custom_call.1} parent=101 // pred_region
          %s884 = sand.u32 %s345, 1
          %s885 = scalar_lea.sflag [#allocation5], %s884
          %s886 = sand.u32 %s345, 1
          %s887 = smul.addr %s886, 8
          %s888 = scalar_lea.vmem [#allocation4], %s887
          %890 = dma.done %s885, 128
        $region106: #{tpu_custom_call.1} parent=101 // pred_fallthru
          _
        // Predicated region
        $region107: #{tpu_custom_call.1} parent=101 // pred_check
          %p891 = pneg %p388
        $region108: #{tpu_custom_call.1} parent=101 // pred_check_branch
          %893 = sbr.rel (%p891) target = $region110
        $region109: #{tpu_custom_call.1} parent=101 // pred_region
          %s894 = sand.u32 %s373, 1
          %s895 = scalar_lea.sflag [#allocation7], %s894
          %s896 = sand.u32 %s373, 1
          %s897 = smul.addr %s896, 32
          %s898 = scalar_lea.vmem [#allocation6], %s897
          %900 = dma.done %s895, 512
        $region110: #{tpu_custom_call.1} parent=101 // pred_fallthru
          _
      $region102: #{tpu_custom_call.1} parent=5 // pred_fallthru
        _
    $region6: #{tpu_custom_call.1} parent=1 // loop_footer
      %s31 = sadd.s32 1, %s27
    $region7: #{tpu_custom_call.1} parent=1 // loop_footer_branch
      %26 = sbr.rel target = $region3
    $region8: #{tpu_custom_call.1} parent=1 // loop_exit
      _
    %901 = vsyncpa [#allocation5], 1
    %s902 = scalar_lea.sflag [#allocation5], 1
    %903 = vsyncpa %s902, 1
    %904 = vsyncpa [#allocation7], 1
    %s905 = scalar_lea.sflag [#allocation7], 1
    %906 = vsyncpa %s905, 1

</llo_original>
